<compile_context>
chip_gen: v5e
topology: v5e:2x2
jax: 0.10.0
libtpu: 0.0.40
codegen_flags: <defaults>
</compile_context>

<pallas_src>
import jax
import jax.numpy as jnp
from jax.experimental import pallas as pl
from jax.experimental.pallas import tpu as pltpu

HIDDEN_PAD = 128            # hidden 100 -> 128
IN_PAD = 8                  # 4 real inputs + 1 constant-1 bias row, padded to 8
OUT_SUB = 8                 # 3 classes + 5 padded rows, on the sublane axis
NEG_BIG = -1e30             # finite "-inf" for padded class logits
_CARRY = HIDDEN_PAD - 1     # padded hidden row that carries a constant 1


def mlp_softmax_kernel(xT_ref, w1_ref, w2_ref, w3_ref, o_ref):
    # Everything is transposed: activations are (feature, TB) so the class
    # axis lands on sublanes and the batch axis is lane-dense.
    xT = xT_ref[...]                                                 # (8, TB)

    # fc1 (+ b1 folded via the constant-1 input row) and ReLU.
    h = jnp.dot(w1_ref[...], xT, preferred_element_type=jnp.float32)
    h = jnp.maximum(h, 0.0)                                          # (128, TB)

    # fc2 (+ b2 folded via the carry row). No activation (matches PyTorch).
    h = jnp.dot(w2_ref[...], h, preferred_element_type=jnp.float32)  # (128, TB)

    # fc3 (+ b3 folded; padded class rows get -1e30 so they vanish below).
    logits = jnp.dot(w3_ref[...], h,
                     preferred_element_type=jnp.float32)             # (8, TB)

    # Numerically stable softmax over the class (sublane) axis — only ~TB/128
    # vregs of exp/max/sum work per tile.
    m = jnp.max(logits, axis=0, keepdims=True)
    e = jnp.exp(logits - m)
    denom = jnp.sum(e, axis=0, keepdims=True)
    inv = pl.reciprocal(denom, approx=False)                         # EUP slot
    o_ref[...] = (e * inv).astype(o_ref.dtype)                       # lane-dense


def _round_up(a, m):
    return ((a + m - 1) // m) * m


def net_forward(x, params, *, block_b=1024):
    w1, b1, w2, b2, w3, b3 = params
    B, in_dim = x.shape
    hid = w1.shape[1]
    out_dim = w3.shape[1]
    f32 = jnp.float32

    # ---- transposed, bias-folded, zero-padded weights (exact no-op math). ----
    w1p = jnp.zeros((HIDDEN_PAD, IN_PAD), f32)
    w1p = w1p.at[:hid, :in_dim].set(w1.T.astype(f32))
    w1p = w1p.at[:hid, in_dim].set(b1.astype(f32))      # b1 via ones row
    w1p = w1p.at[_CARRY, in_dim].set(1.0)               # carry a constant 1

    w2p = jnp.zeros((HIDDEN_PAD, HIDDEN_PAD), f32)
    w2p = w2p.at[:hid, :hid].set(w2.T.astype(f32))
    w2p = w2p.at[:hid, _CARRY].set(b2.astype(f32))      # b2 via carry row
    w2p = w2p.at[_CARRY, _CARRY].set(1.0)               # keep carrying the 1

    w3p = jnp.zeros((OUT_SUB, HIDDEN_PAD), f32)
    w3p = w3p.at[:out_dim, :hid].set(w3.T.astype(f32))
    w3p = w3p.at[:out_dim, _CARRY].set(b3.astype(f32))  # b3 via carry row
    w3p = w3p.at[out_dim:, _CARRY].set(NEG_BIG)         # padded classes -> -1e30

    # ---- batch tiling: TB is lane-dense (multiple of 128); use >=2 grid
    # steps when the batch allows so v7x can split the parallel axis. ----
    B128 = _round_up(max(B, 1), 128)
    n_steps = max(1, -(-B128 // block_b))
    if B128 >= 256:
        n_steps = max(n_steps, 2)
    TB = _round_up(-(-B128 // n_steps), 128)
    B_pad = n_steps * TB

    # ---- transposed, lane-dense input with a folded constant-1 bias row. ----
    xT = jnp.zeros((IN_PAD, B_pad), f32)
    xT = xT.at[:in_dim, :B].set(x.T.astype(f32))
    xT = xT.at[in_dim, :].set(1.0)

    def const_spec(a):
        return pl.BlockSpec(a.shape, lambda i: (0, 0))

    # VMEM guardrail — only kicks in for very large TB (v5e's 16 MiB default).
    vmem_est = ((w1p.size + w2p.size + w3p.size) * 4
                + 2 * 2 * (IN_PAD * TB * 4)          # double-buffered x / out
                + 4 * (HIDDEN_PAD * TB * 4))         # in-kernel activations
    vmem_limit = None
    if vmem_est > 12 * 1024 * 1024:
        vmem_limit = min(vmem_est + (8 << 20), 56 * 1024 * 1024)

    out = pl.pallas_call(
        mlp_softmax_kernel,
        out_shape=jax.ShapeDtypeStruct((OUT_SUB, B_pad), f32),
        grid=(B_pad // TB,),
        in_specs=[
            pl.BlockSpec((IN_PAD, TB), lambda i: (0, i)),   # streamed x tiles
            const_spec(w1p), const_spec(w2p), const_spec(w3p),  # resident weights
        ],
        out_specs=pl.BlockSpec((OUT_SUB, TB), lambda i: (0, i)),
        compiler_params=pltpu.CompilerParams(
            dimension_semantics=("parallel",),              # v7x: 2nd TC
            vmem_limit_bytes=vmem_limit),
    )(xT, w1p, w2p, w3p)

    # Drop padded classes / batch rows and restore (B, out_dim) orientation.
    return out[:out_dim, :B].T


def init_params(key):
    """PyTorch-Linear-style init; weights stored (in, out) so reference does x@W."""
    k1, k2, k3, k4, k5, k6 = jax.random.split(key, 6)

    def lin(kw, kb, fan_in, fan_out):
        bound = 1.0 / jnp.sqrt(fan_in)
        w = jax.random.uniform(kw, (fan_in, fan_out), jnp.float32, -bound, bound)
        b = jax.random.uniform(kb, (fan_out,), jnp.float32, -bound, bound)
        return w, b

    w1, b1 = lin(k1, k2, 4, 100)
    w2, b2 = lin(k3, k4, 100, 100)
    w3, b3 = lin(k5, k6, 100, 3)
    return (w1, b1, w2, b2, w3, b3)


def reference_forward(x, params):
    w1, b1, w2, b2, w3, b3 = params
    h = jnp.maximum(x @ w1 + b1, 0.0)
    h = h @ w2 + b2
    logits = h @ w3 + b3
    return jax.nn.softmax(logits, axis=1)


if __name__ == "__main__":
    key = jax.random.PRNGKey(0)
    kx, kp = jax.random.split(key)
    params = init_params(kp)

    # Small single-tile case.
    B = 8
    x = jax.random.normal(kx, (B, 4), dtype=jnp.float32)
    out = jax.block_until_ready(net_forward(x, params))
    ref = reference_forward(x, params)
    assert out.shape == (B, 3), out.shape
    assert jnp.allclose(out, ref, atol=1e-5, rtol=1e-5), "mismatch vs reference"
    assert jnp.allclose(jnp.sum(out, axis=1), 1.0, atol=1e-5)

    # Multi-tile case (exercises batch padding + 2-step parallel grid).
    B2 = 200
    x2 = jax.random.normal(jax.random.PRNGKey(1), (B2, 4), dtype=jnp.float32)
    out2 = jax.block_until_ready(net_forward(x2, params))
    ref2 = reference_forward(x2, params)
    assert out2.shape == (B2, 3), out2.shape
    assert jnp.allclose(out2, ref2, atol=1e-5, rtol=1e-5), "mismatch (multi-tile)"

    print("KERNEL_OK")
</pallas_src>

<mosaic_0001>
module attributes {stable_mosaic.version = 11 : i64} {
  func.func @mlp_softmax_kernel(%arg0: i32, %arg1: memref<8x128xf32, #tpu.memory_space<vmem>>, %arg2: memref<128x8xf32, #tpu.memory_space<vmem>>, %arg3: memref<128x128xf32, #tpu.memory_space<vmem>>, %arg4: memref<8x128xf32, #tpu.memory_space<vmem>>, %arg5: memref<8x128xf32, #tpu.memory_space<vmem>>) attributes {dimension_semantics = [#tpu.dimension_semantics<parallel>], iteration_bounds = array<i64: 1>, scalar_prefetch = 0 : i64, scratch_operands = 0 : i64, tpu.core_type = #tpu.core_type<tc>, window_params = [{transform_indices = @transform_0, window_bounds = array<i64: 8, 128>}, {pipeline_mode = #tpu.pipeline_mode<synchronous>, transform_indices = @transform_1, window_bounds = array<i64: 128, 8>}, {pipeline_mode = #tpu.pipeline_mode<synchronous>, transform_indices = @transform_2, window_bounds = array<i64: 128, 128>}, {pipeline_mode = #tpu.pipeline_mode<synchronous>, transform_indices = @transform_3, window_bounds = array<i64: 8, 128>}, {transform_indices = @transform_4, window_bounds = array<i64: 8, 128>}]} {
    %c0 = arith.constant 0 : index
    %c0_0 = arith.constant 0 : index
    %0 = vector.load %arg1[%c0, %c0_0] : memref<8x128xf32, #tpu.memory_space<vmem>>, vector<8x128xf32>
    %c0_1 = arith.constant 0 : index
    %c0_2 = arith.constant 0 : index
    %1 = vector.load %arg2[%c0_1, %c0_2] : memref<128x8xf32, #tpu.memory_space<vmem>>, vector<128x8xf32>
    %cst = arith.constant dense<0.000000e+00> : vector<128x128xf32>
    %2 = tpu.matmul %1, %0, %cst {dimension_numbers = #tpu.dot_dimension_numbers<[1], [0], [0], [1], [0, 0, 1, 1], [], []>} : vector<128x8xf32>, vector<8x128xf32>, vector<128x128xf32> -> vector<128x128xf32>
    %cst_3 = arith.constant 0.000000e+00 : f32
    %3 = vector.broadcast %cst_3 : f32 to vector<128x128xf32>
    %4 = arith.maximumf %2, %3 : vector<128x128xf32>
    %c0_4 = arith.constant 0 : index
    %c0_5 = arith.constant 0 : index
    %5 = vector.load %arg3[%c0_4, %c0_5] : memref<128x128xf32, #tpu.memory_space<vmem>>, vector<128x128xf32>
    %cst_6 = arith.constant dense<0.000000e+00> : vector<128x128xf32>
    %6 = tpu.matmul %5, %4, %cst_6 {dimension_numbers = #tpu.dot_dimension_numbers<[1], [0], [0], [1], [0, 0, 1, 1], [], []>} : vector<128x128xf32>, vector<128x128xf32>, vector<128x128xf32> -> vector<128x128xf32>
    %c0_7 = arith.constant 0 : index
    %c0_8 = arith.constant 0 : index
    %7 = vector.load %arg4[%c0_7, %c0_8] : memref<8x128xf32, #tpu.memory_space<vmem>>, vector<8x128xf32>
    %cst_9 = arith.constant dense<0.000000e+00> : vector<8x128xf32>
    %8 = tpu.matmul %7, %6, %cst_9 {dimension_numbers = #tpu.dot_dimension_numbers<[1], [0], [0], [1], [0, 0, 1, 1], [], []>} : vector<8x128xf32>, vector<128x128xf32>, vector<8x128xf32> -> vector<8x128xf32>
    %cst_10 = arith.constant dense<0xFF800000> : vector<128xf32>
    %9 = vector.multi_reduction <maximumf>, %8, %cst_10 [0] : vector<8x128xf32> to vector<128xf32>
    %10 = vector.shape_cast %9 : vector<128xf32> to vector<1x128xf32>
    %11 = vector.broadcast %10 : vector<1x128xf32> to vector<8x128xf32>
    %12 = arith.subf %8, %11 : vector<8x128xf32>
    %13 = math.exp %12 : vector<8x128xf32>
    %cst_11 = arith.constant dense<0.000000e+00> : vector<128xf32>
    %14 = vector.multi_reduction <add>, %13, %cst_11 [0] : vector<8x128xf32> to vector<128xf32>
    %15 = vector.shape_cast %14 : vector<128xf32> to vector<1x128xf32>
    %16 = tpu.reciprocal %15 : vector<1x128xf32> -> vector<1x128xf32>
    %17 = vector.broadcast %16 : vector<1x128xf32> to vector<8x128xf32>
    %18 = arith.mulf %13, %17 : vector<8x128xf32>
    %c0_12 = arith.constant 0 : index
    %c0_13 = arith.constant 0 : index
    %19 = vector.load %arg5[%c0_12, %c0_13] : memref<8x128xf32, #tpu.memory_space<vmem>>, vector<8x128xf32>
    tpu.vector_store %arg5[%c0_12, %c0_13], %18 {strides = array<i32>} : memref<8x128xf32, #tpu.memory_space<vmem>>, vector<8x128xf32>,
    return
  }
  func.func @transform_0(%arg0: i32) -> (i32, i32) {
    %c0_i32 = arith.constant 0 : i32
    %c0_i32_0 = arith.constant 0 : i32
    return %c0_i32, %arg0 : i32, i32
  }
  func.func @transform_1(%arg0: i32) -> (i32, i32) {
    %c0_i32 = arith.constant 0 : i32
    %c0_i32_0 = arith.constant 0 : i32
    %c0_i32_1 = arith.constant 0 : i32
    return %c0_i32, %c0_i32_0 : i32, i32
  }
  func.func @transform_2(%arg0: i32) -> (i32, i32) {
    %c0_i32 = arith.constant 0 : i32
    %c0_i32_0 = arith.constant 0 : i32
    %c0_i32_1 = arith.constant 0 : i32
    return %c0_i32, %c0_i32_0 : i32, i32
  }
  func.func @transform_3(%arg0: i32) -> (i32, i32) {
    %c0_i32 = arith.constant 0 : i32
    %c0_i32_0 = arith.constant 0 : i32
    %c0_i32_1 = arith.constant 0 : i32
    return %c0_i32, %c0_i32_0 : i32, i32
  }
  func.func @transform_4(%arg0: i32) -> (i32, i32) {
    %c0_i32 = arith.constant 0 : i32
    %c0_i32_0 = arith.constant 0 : i32
    return %c0_i32, %arg0 : i32, i32
  }
}

</mosaic_0001>

<llo_original>
// kernel: tpu_custom_call.1
$region0: #{tpu_custom_call.1}
  #allocation0 [shape = 'u32[]', space=smem, size = 0x4, offset = 0x4, fixed_abs, tag = 'smem constant byte address 0x4 - core index']
  #allocation1 [shape = 'u32[72,128]{1,0:T(1,128)}', space=vmem, size = 0x9000, scoped, tag = 'internal scratch']
  %s0 = inlined_call_operand.vmem [shape: f32[8,128], index: 0, kind: input, shape index: {}]
  %s1 = inlined_call_operand.vmem [shape: f32[128,8], index: 1, kind: input, shape index: {}]
  %s2 = inlined_call_operand.vmem [shape: f32[128,128], index: 2, kind: input, shape index: {}]
  %s3 = inlined_call_operand.hbm [shape: f32[8,128], index: 3, kind: input, shape index: {}]
  %s4 = inlined_call_operand.hbm [shape: f32[8,128], index: 4, kind: output, shape index: {}]
  %s5 = sld [smem:[#allocation0]]
  $region30: #{tpu_custom_call.1} parent=0
    _
  %s7 = ssub.s32 1, %s5
  %s8 = scalar_select 0, %s7, %s5
  $region1: #{tpu_custom_call.1} parent=0
    #allocation2 [shape = 'u8[4096]{0}', space=vmem, size = 0x1000, scoped, tag = 'input window, operand 3, single buffered']
    #allocation3 [shape = 's32[1]{0}', space=sflag, size = 0x4, scoped, tag = 'scoped memory for tpu_custom_call.1']
    #allocation4 [shape = 's32[1]{0}', space=sflag, size = 0x4, scoped, tag = 'scoped memory for tpu_custom_call.1']
    #allocation5 [shape = 'u8[4096]{0}', space=vmem, size = 0x1000, scoped, tag = 'output window, operand 0, single buffered']
    %9 = vsyncpa [#allocation3], 0
    %10 = vsyncpa [#allocation4], 0
    // Predicated region
    $region2: #{tpu_custom_call.1} parent=1 // pred_check
      _
    $region3: #{tpu_custom_call.1} parent=1 // pred_check_branch
      %12 = sbr.rel (0) target = $region5
    $region4: #{tpu_custom_call.1} parent=1 // pred_region
      _
    $region5: #{tpu_custom_call.1} parent=1 // pred_fallthru
      _
    // Predicated region
    $region6: #{tpu_custom_call.1} parent=1 // pred_check
      _
    $region7: #{tpu_custom_call.1} parent=1 // pred_check_branch
      %14 = sbr.rel (0) target = $region9
    $region8: #{tpu_custom_call.1} parent=1 // pred_region
      _
    $region9: #{tpu_custom_call.1} parent=1 // pred_fallthru
      _
    // Predicated region
    $region10: #{tpu_custom_call.1} parent=1 // pred_check
      _
    $region11: #{tpu_custom_call.1} parent=1 // pred_check_branch
      %16 = sbr.rel (0) target = $region13
    $region12: #{tpu_custom_call.1} parent=1 // pred_region
      _
    $region13: #{tpu_custom_call.1} parent=1 // pred_fallthru
      _
    // Predicated region
    $region14: #{tpu_custom_call.1} parent=1 // pred_check
      _
    $region15: #{tpu_custom_call.1} parent=1 // pred_check_branch
      %18 = sbr.rel (0) target = $region17
    $region16: #{tpu_custom_call.1} parent=1 // pred_region
      %20 = vsyncadd [#allocation3], 0
      %s22 = sshll.u32 %s3, 4
      %s23 = int_to_ptr.hbm [resolvable:$true] %s22
      %s24 = sshll.u32 [#allocation2], 4
      %s25 = int_to_ptr.vmem [resolvable:$true] %s24
      %27 = dma.hbm_to_vmem [thread:$0]  %s23, 128, %s25, [#allocation3]
    $region17: #{tpu_custom_call.1} parent=1 // pred_fallthru
      _
    // Predicated region
    $region18: #{tpu_custom_call.1} parent=1 // pred_check
      _
    $region19: #{tpu_custom_call.1} parent=1 // pred_check_branch
      %29 = sbr.rel (0) target = $region21
    $region20: #{tpu_custom_call.1} parent=1 // pred_region
      %31 = dma.done [#allocation3], 128
    $region21: #{tpu_custom_call.1} parent=1 // pred_fallthru
      _
    %v32 = vld [vmem:[%s0] sm:$0xff]
    %v33 = vld [vmem:[%s1] sm:$0xff]
    %v34 = vld [vmem:[%s1 + $0x8] sm:$0xff]
    %v35 = vld [vmem:[%s1 + $0x10] sm:$0xff]
    %v36 = vld [vmem:[%s1 + $0x18] sm:$0xff]
    %v37 = vld [vmem:[%s1 + $0x20] sm:$0xff]
    %v38 = vld [vmem:[%s1 + $0x28] sm:$0xff]
    %v39 = vld [vmem:[%s1 + $0x30] sm:$0xff]
    %v40 = vld [vmem:[%s1 + $0x38] sm:$0xff]
    %v41 = vld [vmem:[%s1 + $0x40] sm:$0xff]
    %v42 = vld [vmem:[%s1 + $0x48] sm:$0xff]
    %v43 = vld [vmem:[%s1 + $0x50] sm:$0xff]
    %v44 = vld [vmem:[%s1 + $0x58] sm:$0xff]
    %v45 = vld [vmem:[%s1 + $0x60] sm:$0xff]
    %v46 = vld [vmem:[%s1 + $0x68] sm:$0xff]
    %v47 = vld [vmem:[%s1 + $0x70] sm:$0xff]
    %v48 = vld [vmem:[%s1 + $0x78] sm:$0xff]
    %vm49 = vcmask 64512
    %v51 = vsel %vm49, %v33, 0
    %v54 = vsel %vm49, %v34, 0
    %v57 = vsel %vm49, %v35, 0
    %v60 = vsel %vm49, %v36, 0
    %v63 = vsel %vm49, %v37, 0
    %v66 = vsel %vm49, %v38, 0
    %v69 = vsel %vm49, %v39, 0
    %v72 = vsel %vm49, %v40, 0
    %v75 = vsel %vm49, %v41, 0
    %v78 = vsel %vm49, %v42, 0
    %v81 = vsel %vm49, %v43, 0
    %v84 = vsel %vm49, %v44, 0
    %v87 = vsel %vm49, %v45, 0
    %v90 = vsel %vm49, %v46, 0
    %v93 = vsel %vm49, %v47, 0
    %v96 = vsel %vm49, %v48, 0
    %98 = vmatpush.msra.mxu0 0.0
    %99 = vmatpush.msra.mxu0 0.0
    %100 = vmatpush.msra.mxu0 0.0
    %101 = vmatpush.msra.mxu0 0.0
    %102 = vmatpush.msra.mxu0 0.0
    %103 = vmatpush.msra.mxu0 0.0
    %104 = vmatpush.msra.mxu0 0.0
    %105 = vmatpush.msra.mxu0 0.0
    %106 = vmatpush.msra.mxu0 0.0
    %107 = vmatpush.msra.mxu0 0.0
    %108 = vmatpush.msra.mxu0 0.0
    %109 = vmatpush.msra.mxu0 0.0
    %110 = vmatpush.msra.mxu0 0.0
    %111 = vmatpush.msra.mxu0 0.0
    %112 = vmatpush.msra.mxu0 0.0
    %113 = vmatpush.msra.mxu0 %v32
    %114 = vmatmul.f32.gmra.mxu0 %v51
    %v115 = vpop.f32.mrf.mxu0
    %v116 = vadd.f32 0.0, %v115
    %117 = vmatmul.f32.gmra.mxu0 %v54
    %v118 = vpop.f32.mrf.mxu0
    %v119 = vadd.f32 0.0, %v118
    %120 = vmatmul.f32.gmra.mxu0 %v57
    %v121 = vpop.f32.mrf.mxu0
    %v122 = vadd.f32 0.0, %v121
    %123 = vmatmul.f32.gmra.mxu0 %v60
    %v124 = vpop.f32.mrf.mxu0
    %v125 = vadd.f32 0.0, %v124
    %126 = vmatmul.f32.gmra.mxu0 %v63
    %v127 = vpop.f32.mrf.mxu0
    %v128 = vadd.f32 0.0, %v127
    %129 = vmatmul.f32.gmra.mxu0 %v66
    %v130 = vpop.f32.mrf.mxu0
    %v131 = vadd.f32 0.0, %v130
    %132 = vmatmul.f32.gmra.mxu0 %v69
    %v133 = vpop.f32.mrf.mxu0
    %v134 = vadd.f32 0.0, %v133
    %135 = vmatmul.f32.gmra.mxu0 %v72
    %v136 = vpop.f32.mrf.mxu0
    %v137 = vadd.f32 0.0, %v136
    %138 = vmatmul.f32.gmra.mxu0 %v75
    %v139 = vpop.f32.mrf.mxu0
    %v140 = vadd.f32 0.0, %v139
    %141 = vmatmul.f32.gmra.mxu0 %v78
    %v142 = vpop.f32.mrf.mxu0
    %v143 = vadd.f32 0.0, %v142
    %144 = vmatmul.f32.gmra.mxu0 %v81
    %v145 = vpop.f32.mrf.mxu0
    %v146 = vadd.f32 0.0, %v145
    %147 = vmatmul.f32.gmra.mxu0 %v84
    %v148 = vpop.f32.mrf.mxu0
    %v149 = vadd.f32 0.0, %v148
    %150 = vmatmul.f32.gmra.mxu0 %v87
    %v151 = vpop.f32.mrf.mxu0
    %v152 = vadd.f32 0.0, %v151
    %153 = vmatmul.f32.gmra.mxu0 %v90
    %v154 = vpop.f32.mrf.mxu0
    %v155 = vadd.f32 0.0, %v154
    %156 = vmatmul.f32.gmra.mxu0 %v93
    %v157 = vpop.f32.mrf.mxu0
    %v158 = vadd.f32 0.0, %v157
    %159 = vmatmul.f32.gmra.mxu0 %v96
    %v160 = vpop.f32.mrf.mxu0
    %v161 = vadd.f32 0.0, %v160
    %162 = vdwg.mxu0
    %v163 = vmax.f32 %v116, 0.0
    %v164 = vmax.f32 %v119, 0.0
    %v165 = vmax.f32 %v122, 0.0
    %v166 = vmax.f32 %v125, 0.0
    %v167 = vmax.f32 %v128, 0.0
    %v168 = vmax.f32 %v131, 0.0
    %v169 = vmax.f32 %v134, 0.0
    %v170 = vmax.f32 %v137, 0.0
    %v171 = vmax.f32 %v140, 0.0
    %v172 = vmax.f32 %v143, 0.0
    %v173 = vmax.f32 %v146, 0.0
    %v174 = vmax.f32 %v149, 0.0
    %v175 = vmax.f32 %v152, 0.0
    %v176 = vmax.f32 %v155, 0.0
    %v177 = vmax.f32 %v158, 0.0
    %v178 = vmax.f32 %v161, 0.0
    %v179 = vld [vmem:[%s2] sm:$0xff]
    %v180 = vld [vmem:[%s2 + $0x8] sm:$0xff]
    %v181 = vld [vmem:[%s2 + $0x10] sm:$0xff]
    %v182 = vld [vmem:[%s2 + $0x18] sm:$0xff]
    %v183 = vld [vmem:[%s2 + $0x20] sm:$0xff]
    %v184 = vld [vmem:[%s2 + $0x28] sm:$0xff]
    %v185 = vld [vmem:[%s2 + $0x30] sm:$0xff]
    %v186 = vld [vmem:[%s2 + $0x38] sm:$0xff]
    %v187 = vld [vmem:[%s2 + $0x40] sm:$0xff]
    %v188 = vld [vmem:[%s2 + $0x48] sm:$0xff]
    %v189 = vld [vmem:[%s2 + $0x50] sm:$0xff]
    %v190 = vld [vmem:[%s2 + $0x58] sm:$0xff]
    %v191 = vld [vmem:[%s2 + $0x60] sm:$0xff]
    %v192 = vld [vmem:[%s2 + $0x68] sm:$0xff]
    %v193 = vld [vmem:[%s2 + $0x70] sm:$0xff]
    %v194 = vld [vmem:[%s2 + $0x78] sm:$0xff]
    %195 = vmatpush.msra.mxu0 %v178
    %196 = vmatpush.msra.mxu0 %v177
    %197 = vmatpush.msra.mxu0 %v176
    %198 = vmatpush.msra.mxu0 %v175
    %199 = vmatpush.msra.mxu0 %v174
    %200 = vmatpush.msra.mxu0 %v173
    %201 = vmatpush.msra.mxu0 %v172
    %202 = vmatpush.msra.mxu0 %v171
    %203 = vmatpush.msra.mxu0 %v170
    %204 = vmatpush.msra.mxu0 %v169
    %205 = vmatpush.msra.mxu0 %v168
    %206 = vmatpush.msra.mxu0 %v167
    %207 = vmatpush.msra.mxu0 %v166
    %208 = vmatpush.msra.mxu0 %v165
    %209 = vmatpush.msra.mxu0 %v164
    %210 = vmatpush.msra.mxu0 %v163
    %211 = vmatmul.f32.gmra.mxu0 %v179
    %v212 = vpop.f32.mrf.mxu0
    %v213 = vadd.f32 0.0, %v212
    %214 = vmatmul.f32.gmra.mxu0 %v180
    %v215 = vpop.f32.mrf.mxu0
    %v216 = vadd.f32 0.0, %v215
    %217 = vmatmul.f32.gmra.mxu0 %v181
    %v218 = vpop.f32.mrf.mxu0
    %v219 = vadd.f32 0.0, %v218
    %220 = vmatmul.f32.gmra.mxu0 %v182
    %v221 = vpop.f32.mrf.mxu0
    %v222 = vadd.f32 0.0, %v221
    %223 = vmatmul.f32.gmra.mxu0 %v183
    %v224 = vpop.f32.mrf.mxu0
    %v225 = vadd.f32 0.0, %v224
    %226 = vmatmul.f32.gmra.mxu0 %v184
    %v227 = vpop.f32.mrf.mxu0
    %v228 = vadd.f32 0.0, %v227
    %229 = vmatmul.f32.gmra.mxu0 %v185
    %v230 = vpop.f32.mrf.mxu0
    %v231 = vadd.f32 0.0, %v230
    %232 = vmatmul.f32.gmra.mxu0 %v186
    %v233 = vpop.f32.mrf.mxu0
    %v234 = vadd.f32 0.0, %v233
    %235 = vmatmul.f32.gmra.mxu0 %v187
    %v236 = vpop.f32.mrf.mxu0
    %v237 = vadd.f32 0.0, %v236
    %238 = vmatmul.f32.gmra.mxu0 %v188
    %v239 = vpop.f32.mrf.mxu0
    %v240 = vadd.f32 0.0, %v239
    %241 = vmatmul.f32.gmra.mxu0 %v189
    %v242 = vpop.f32.mrf.mxu0
    %v243 = vadd.f32 0.0, %v242
    %244 = vmatmul.f32.gmra.mxu0 %v190
    %v245 = vpop.f32.mrf.mxu0
    %v246 = vadd.f32 0.0, %v245
    %247 = vmatmul.f32.gmra.mxu0 %v191
    %v248 = vpop.f32.mrf.mxu0
    %v249 = vadd.f32 0.0, %v248
    %250 = vmatmul.f32.gmra.mxu0 %v192
    %v251 = vpop.f32.mrf.mxu0
    %v252 = vadd.f32 0.0, %v251
    %253 = vmatmul.f32.gmra.mxu0 %v193
    %v254 = vpop.f32.mrf.mxu0
    %v255 = vadd.f32 0.0, %v254
    %256 = vmatmul.f32.gmra.mxu0 %v194
    %v257 = vpop.f32.mrf.mxu0
    %v258 = vadd.f32 0.0, %v257
    %259 = vdwg.mxu0
    %v260 = vld [vmem:[#allocation2] sm:$0xff]
    %261 = vmatpush.msra.mxu0 %v258
    %262 = vmatpush.msra.mxu0 %v255
    %263 = vmatpush.msra.mxu0 %v252
    %264 = vmatpush.msra.mxu0 %v249
    %265 = vmatpush.msra.mxu0 %v246
    %266 = vmatpush.msra.mxu0 %v243
    %267 = vmatpush.msra.mxu0 %v240
    %268 = vmatpush.msra.mxu0 %v237
    %269 = vmatpush.msra.mxu0 %v234
    %270 = vmatpush.msra.mxu0 %v231
    %271 = vmatpush.msra.mxu0 %v228
    %272 = vmatpush.msra.mxu0 %v225
    %273 = vmatpush.msra.mxu0 %v222
    %274 = vmatpush.msra.mxu0 %v219
    %275 = vmatpush.msra.mxu0 %v216
    %276 = vmatpush.msra.mxu0 %v213
    %277 = vmatmul.f32.gmra.mxu0 %v260
    %v278 = vpop.f32.mrf.mxu0
    %v279 = vadd.f32 0.0, %v278
    %280 = vdwg.mxu0
    %v281 = vrot.slane %v279, 4
    %v282 = vmax.f32 %v279, %v281
    %v283 = vrot.slane %v282, 2
    %v284 = vmax.f32 %v282, %v283
    %v285 = vrot.slane %v284, 1
    %v286 = vmax.f32 %v284, %v285
    %v287 = vsub.f32 %v279, %v286
    %v288 = vmul.f32 %v287, 1.442695
    %v289 = vpow.pop %v288
    %v290 = vrot.slane %v289, 4
    %v291 = vadd.f32 %v289, %v290
    %v292 = vrot.slane %v291, 2
    %v293 = vadd.f32 %v291, %v292
    %v294 = vrot.slane %v293, 1
    %v295 = vadd.f32 %v293, %v294
    %v296 = vrcp.pop %v295
    %v297 = vmul.f32 %v295, %v296
    %v298 = vsub.f32 1.0, %v297
    %v299 = vmul.f32 %v296, %v298
    %v300 = vadd.f32 %v296, %v299
    %vm301 = vweird.f32 %v295
    %vm302 = vweird.f32 %v296
    %vm303 = vmor %vm301, %vm302
    %v304 = vsel %vm303, %v296, %v300
    %v305 = vand.u32 2147483647, %v295
    %vm306 = vcmp.eq.f32.partialorder %v305, 8.507059e+37
    %v307 = vand.u32 %v295, 2147483648
    %v308 = vor.u32 1.1754944e-38, %v307
    %v309 = vsel %vm306, %v308, %v304
    %v310 = vmul.f32 %v289, %v309
    %311 = vst [vmem:[#allocation5] sm:$0xff] %v310
    // Predicated region
    $region22: #{tpu_custom_call.1} parent=1 // pred_check
      _
    $region23: #{tpu_custom_call.1} parent=1 // pred_check_branch
      %313 = sbr.rel (0) target = $region25
    $region24: #{tpu_custom_call.1} parent=1 // pred_region
      %315 = vsyncadd [#allocation4], 0
      %s317 = sshll.u32 [#allocation5], 4
      %s318 = int_to_ptr.vmem [resolvable:$true] %s317
      %s319 = sshll.u32 %s4, 4
      %s320 = int_to_ptr.hbm [resolvable:$true] %s319
      %322 = dma.vmem_to_hbm [thread:$0]  %s318, 128, %s320, [#allocation4]
    $region25: #{tpu_custom_call.1} parent=1 // pred_fallthru
      _
    // Predicated region
    $region26: #{tpu_custom_call.1} parent=1 // pred_check
      _
    $region27: #{tpu_custom_call.1} parent=1 // pred_check_branch
      %324 = sbr.rel (0) target = $region29
    $region28: #{tpu_custom_call.1} parent=1 // pred_region
      %326 = dma.done [#allocation4], 128
    $region29: #{tpu_custom_call.1} parent=1 // pred_fallthru
      _
    %327 = vsyncpa [#allocation3], 1
    %328 = vsyncpa [#allocation4], 1

</llo_original>
